<compile_context>
chip_gen: v5e
topology: v5e:2x2
jax: 0.10.0
libtpu: 0.0.40
codegen_flags: <defaults>
</compile_context>

<pallas_src>
import functools
import math

import jax
import jax.numpy as jnp
from jax import lax
from jax.experimental import pallas as pl
from jax.experimental.pallas import tpu as pltpu


def _cdiv(a, b):
    return -(-a // b)


def _round_up(x, m):
    return ((x + m - 1) // m) * m


def _num_tensorcores():
    """Best-effort TensorCore count of the default device (v7x has 2)."""
    try:
        dev = jax.devices()[0]
        kind = str(getattr(dev, "device_kind", "")).lower()
        cores = getattr(dev, "num_cores", None)
        cores = int(cores) if cores else 1
        if "v7" in kind:
            cores = max(cores, 2)
        return max(1, cores)
    except Exception:
        return 1


def _class_sums(a):
    """(C, rows, 128) -> (C, 1) via sublane then lane reduction (XLU, once/sample)."""
    return jnp.sum(jnp.sum(a, axis=1), axis=1, keepdims=True)


def _dice_ce_kernel(pred_ref, mask_ref, stats_ref,
                    acc_int, acc_p, acc_m, acc_ce,
                    *, n_valid, tile_rows, chunk_rows,
                    tiles_per_split, splits, needs_masking):
    """One grid step = (sample*split g, spatial tile s).

    pred_ref : (1, C, tile_rows, 128) logits, native dtype
    mask_ref : (1, 1, tile_rows, 128) int32 labels (padded entries == C)
    stats_ref: (1, C, 4) f32 [intersect, sum p^2, sum onehot, ce_sum (replicated)]
    acc_*    : (C, chunk_rows, 128) / (chunk_rows, 128) f32 cross-tile partials.
    """
    g = pl.program_id(0)
    s = pl.program_id(1)
    C = acc_int.shape[0]
    n_chunks = tile_rows // chunk_rows
    chunk_pix = chunk_rows * 128

    @pl.when(s == 0)
    def _zero():
        acc_int[...] = jnp.zeros_like(acc_int)
        acc_p[...] = jnp.zeros_like(acc_p)
        acc_m[...] = jnp.zeros_like(acc_m)
        acc_ce[...] = jnp.zeros_like(acc_ce)

    # Constants hoisted out of the chunk loop (a handful of vregs).
    cls = lax.broadcasted_iota(jnp.int32, (C, chunk_rows, 128), 0)
    if needs_masking:
        pix = (lax.broadcasted_iota(jnp.int32, (chunk_rows, 128), 0) * 128
               + lax.broadcasted_iota(jnp.int32, (chunk_rows, 128), 1))
        tile_idx = ((g % splits) * tiles_per_split + s) if splits > 1 else s
        tile_start = tile_idx * (tile_rows * 128)

    def chunk_body(ci, carry):
        c_int, c_p, c_m, c_ce = carry
        off = pl.multiple_of(ci * chunk_rows, chunk_rows)
        logits = pred_ref[0, :, pl.ds(off, chunk_rows), :].astype(jnp.float32)
        labels = mask_ref[0, 0, pl.ds(off, chunk_rows), :].astype(jnp.int32)

        # Channel softmax: reductions over the leading axis are elementwise
        # combines across the C (chunk_rows, 128) faces -> pure VPU.
        mx = jnp.max(logits, axis=0)                     # (chunk, 128)
        ex = jnp.exp(logits - mx[None])                  # (C, chunk, 128) EUP
        denom = jnp.sum(ex, axis=0)                      # (chunk, 128)
        r = pl.reciprocal(denom, approx=True)            # EUP rcp
        inv = r * (2.0 - denom * r)                      # one Newton step
        logz = mx + jnp.log(denom)                       # (chunk, 128)

        onehot = (labels[None] == cls).astype(jnp.float32)   # (C, chunk, 128)

        if needs_masking:
            remaining = n_valid - (tile_start + ci * chunk_pix)
            valid = (pix < remaining).astype(jnp.float32)
            inv = inv * valid                            # kills sm -> intersect & psum
            logz = logz * valid                          # kills CE on padded pixels

        sm = ex * inv[None]                              # (C, chunk, 128) softmax
        picked = jnp.sum(onehot * logits, axis=0)        # logit at the true class

        return (c_int + sm * onehot,
                c_p + sm * sm,                           # square_xy=True
                c_m + onehot,                            # onehot^2 == onehot
                c_ce + (logz - picked))

    zc = jnp.zeros((C, chunk_rows, 128), jnp.float32)
    ze = jnp.zeros((chunk_rows, 128), jnp.float32)
    p_int, p_p, p_m, p_ce = lax.fori_loop(0, n_chunks, chunk_body,
                                          (zc, zc, zc, ze))

    # One accumulator read-modify-write per grid step (not per chunk).
    acc_int[...] += p_int
    acc_p[...] += p_p
    acc_m[...] += p_m
    acc_ce[...] += p_ce

    @pl.when(s == pl.num_programs(1) - 1)
    def _finalize():
        intersect = _class_sums(acc_int[...])                      # (C, 1)
        psum = _class_sums(acc_p[...])                             # (C, 1)
        msum = _class_sums(acc_m[...])                             # (C, 1)
        ce11 = jnp.sum(jnp.sum(acc_ce[...], axis=0, keepdims=True),
                       axis=1, keepdims=True)                      # (1, 1)
        stats_ref[0] = jnp.concatenate(
            [intersect, psum, msum, jnp.broadcast_to(ce11, (C, 1))], axis=1)


def dice_ce_loss(pred, mask, *, smooth=(0.0, 1e-6), include_bg=False,
                 dice_lambda=1.0, ce_lambda=1.0,
                 tile_s=262144, spatial_splits=None):
    """pred: (N, C, *spatial) logits; mask: (N, *spatial) or (N, 1, *spatial) labels.

    `pred` is consumed in its native dtype (bf16 logits are encouraged: they
    halve HBM traffic; the kernel casts to f32 after the VMEM load).
    Spatial sizes that are a multiple of 1024 avoid any padding copy.
    """
    N, C = pred.shape[0], pred.shape[1]
    assert C > 1, "softmax / one-hot path requires n_classes > 1"
    if mask.ndim == pred.ndim:
        # TODO(synk): the PyTorch argmax-CE path (mask already one-hot with C
        # channels) is not implemented; only integer-label masks are supported.
        assert mask.shape[1] == 1, "mask must be integer labels"
        mask = mask.reshape((N,) + mask.shape[2:])
    spatial = pred.shape[2:]
    assert mask.shape == (N,) + spatial
    S = math.prod(spatial)

    # Normalize labels to int32 (pad value C always representable, no i64 DMA).
    if mask.dtype != jnp.int32:
        mask = mask.astype(jnp.int32)

    itemsize = pred.dtype.itemsize
    chunk_rows = max(8, 32 // max(1, itemsize))        # 8 f32 / 16 bf16 / 32 int8
    R = _cdiv(S, 128)
    Rc = _round_up(R, chunk_rows)

    # ---- parallel splits of the spatial reduction (dual-TC chips, small N) ----
    if spatial_splits is None:
        cores = _num_tensorcores()
        splits = cores if N < cores else 1
    else:
        splits = max(1, int(spatial_splits))
    splits = max(1, min(splits, Rc // chunk_rows))

    # ---- tile sizing: big balanced tiles under an explicit VMEM budget ----
    per_row_bytes = 2 * 128 * (C * itemsize + 4)       # double-buffered pred + mask
    fixed_bytes = (3 * C + 1) * chunk_rows * 128 * 4 + (1 << 20)
    budget = 28 << 20                                  # safe on v5e/v6e/v7x w/ 48MiB limit
    budget_rows = max(chunk_rows, (budget - fixed_bytes) // per_row_bytes)
    want_rows = max(chunk_rows, tile_s // 128)
    req_rows = max(chunk_rows, (min(want_rows, budget_rows) // chunk_rows) * chunk_rows)

    num_tiles = max(splits, _cdiv(Rc, req_rows))
    num_tiles = _round_up(num_tiles, splits)
    tile_rows = _round_up(_cdiv(Rc, num_tiles), chunk_rows)   # balanced tiles
    tiles_per_split = num_tiles // splits
    padded_R = num_tiles * tile_rows
    padded_S = padded_R * 128
    needs_masking = padded_S != S

    # No dtype casts of pred here; reshape is free when no padding is needed.
    pred_flat = pred.reshape(N, C, S)
    mask_flat = mask.reshape(N, S)
    if needs_masking:
        pad = padded_S - S
        pred_flat = jnp.pad(pred_flat, ((0, 0), (0, 0), (0, pad)))
        mask_flat = jnp.pad(mask_flat, ((0, 0), (0, pad)), constant_values=C)
    pred_4d = pred_flat.reshape(N, C, padded_R, 128)
    mask_4d = mask_flat.reshape(N, 1, padded_R, 128)

    if splits == 1:
        idx_map = lambda g, s: (g, 0, s, 0)
    else:
        idx_map = lambda g, s: (g // splits, 0, (g % splits) * tiles_per_split + s, 0)

    kernel = functools.partial(
        _dice_ce_kernel, n_valid=S, tile_rows=tile_rows, chunk_rows=chunk_rows,
        tiles_per_split=tiles_per_split, splits=splits, needs_masking=needs_masking)

    cost = pl.CostEstimate(
        flops=14 * N * C * padded_S,
        transcendentals=(C + 2) * N * padded_S,
        bytes_accessed=(pred_4d.size * pred_4d.dtype.itemsize
                        + mask_4d.size * 4 + N * splits * C * 4 * 4))

    stats = pl.pallas_call(
        kernel,
        out_shape=jax.ShapeDtypeStruct((N * splits, C, 4), jnp.float32),
        grid_spec=pltpu.PrefetchScalarGridSpec(
            num_scalar_prefetch=0,
            grid=(N * splits, tiles_per_split),
            in_specs=[
                pl.BlockSpec((1, C, tile_rows, 128), idx_map),
                pl.BlockSpec((1, 1, tile_rows, 128), idx_map),
            ],
            out_specs=pl.BlockSpec((1, C, 4), lambda g, s: (g, 0, 0)),
            scratch_shapes=[
                pltpu.VMEM((C, chunk_rows, 128), jnp.float32),   # intersect acc
                pltpu.VMEM((C, chunk_rows, 128), jnp.float32),   # pred^2 acc
                pltpu.VMEM((C, chunk_rows, 128), jnp.float32),   # onehot acc
                pltpu.VMEM((chunk_rows, 128), jnp.float32),      # ce acc
            ]),
        compiler_params=pltpu.CompilerParams(
            dimension_semantics=("parallel", "arbitrary"),
            vmem_limit_bytes=48 * 1024 * 1024),
        cost_estimate=cost,
    )(pred_4d, mask_4d)

    # Tiny final reductions / smoothing in plain JAX.
    stats = stats.reshape(N, splits, C, 4)
    ce_sum = jnp.sum(stats[:, :, 0, 3])               # total NLL over all real pixels
    dice_parts = jnp.sum(stats[..., :3], axis=1)      # (N, C, 3), additive over splits
    intersect = dice_parts[..., 0]
    psum = dice_parts[..., 1]
    msum = dice_parts[..., 2]

    sm_nr, sm_dr = smooth
    if (not include_bg) and C > 1:
        intersect, psum, msum = intersect[:, 1:], psum[:, 1:], msum[:, 1:]
    dice = jnp.mean(1.0 - (2.0 * intersect + sm_nr) / (psum + msum + sm_dr))
    ce = ce_sum / (N * S)                             # ce_weight=None, reduction='mean'
    return dice_lambda * dice + ce_lambda * ce


def _reference_dice_ce(pred, mask, *, smooth=(0.0, 1e-6), include_bg=False,
                       dice_lambda=1.0, ce_lambda=1.0):
    """Plain-JAX re-implementation of the PyTorch module for verification."""
    N, C = pred.shape[0], pred.shape[1]
    p = jax.nn.softmax(pred.astype(jnp.float32), axis=1)
    m = jax.nn.one_hot(mask, C, axis=1, dtype=jnp.float32)
    if not include_bg and C > 1:
        p_d, m_d = p[:, 1:], m[:, 1:]
    else:
        p_d, m_d = p, m
    red = tuple(range(2, pred.ndim))
    intersect = jnp.sum(p_d * m_d, axis=red)
    psum = jnp.sum(p_d ** 2, axis=red)
    msum = jnp.sum(m_d ** 2, axis=red)
    sm_nr, sm_dr = smooth
    dice = jnp.mean(1.0 - (2 * intersect + sm_nr) / (psum + msum + sm_dr))
    logp = jax.nn.log_softmax(pred.astype(jnp.float32), axis=1)
    nll = -jnp.sum(jax.nn.one_hot(mask, C, axis=1) * logp, axis=1)
    ce = jnp.mean(nll)
    return dice_lambda * dice + ce_lambda * ce


if __name__ == "__main__":
    key = jax.random.PRNGKey(0)
    kp, km, kp2, km2 = jax.random.split(key, 4)

    # Case 1: classic NCDHW volume, spatial size a multiple of 1024 (no padding).
    N, C, D, H, W = 2, 4, 8, 16, 16              # S = 2048
    pred = jax.random.normal(kp, (N, C, D, H, W), dtype=jnp.float32)
    mask = jax.random.randint(km, (N, D, H, W), 0, C, dtype=jnp.int32)
    loss = jax.block_until_ready(dice_ce_loss(pred, mask))
    ref = _reference_dice_ce(pred, mask)
    assert jnp.allclose(loss, ref, rtol=1e-4, atol=1e-4), (loss, ref)

    # Case 2: ragged spatial size (exercises the padding / validity-mask path).
    N2, C2, D2, H2, W2 = 2, 3, 5, 9, 7           # S = 315, not a multiple of 128
    pred2 = jax.random.normal(kp2, (N2, C2, D2, H2, W2), dtype=jnp.float32)
    mask2 = jax.random.randint(km2, (N2, D2, H2, W2), 0, C2, dtype=jnp.int32)
    loss2 = jax.block_until_ready(dice_ce_loss(pred2, mask2))
    ref2 = _reference_dice_ce(pred2, mask2)
    assert jnp.allclose(loss2, ref2, rtol=1e-4, atol=1e-4), (loss2, ref2)

    # Case 3: small tiles + explicit spatial split across the parallel grid axis.
    loss3 = jax.block_until_ready(
        dice_ce_loss(pred, mask, tile_s=1024, spatial_splits=2))
    assert jnp.allclose(loss3, ref, rtol=1e-4, atol=1e-4), (loss3, ref)

    # Case 4: bf16 logits straight from the caller (no wrapper cast, 16-row chunks).
    pred_bf16 = pred.astype(jnp.bfloat16)
    loss4 = jax.block_until_ready(dice_ce_loss(pred_bf16, mask))
    ref4 = _reference_dice_ce(pred_bf16, mask)
    assert jnp.allclose(loss4, ref4, rtol=1e-4, atol=1e-4), (loss4, ref4)

    print("KERNEL_OK")
</pallas_src>

<mosaic_0001>
module attributes {stable_mosaic.version = 11 : i64} {
  func.func @_dice_ce_kernel(%arg0: i32, %arg1: i32, %arg2: memref<1x4x16x128xf32, #tpu.memory_space<vmem>>, %arg3: memref<1x1x16x128xi32, #tpu.memory_space<vmem>>, %arg4: memref<1x4x4xf32, #tpu.memory_space<vmem>>, %arg5: memref<4x8x128xf32, #tpu.memory_space<vmem>>, %arg6: memref<4x8x128xf32, #tpu.memory_space<vmem>>, %arg7: memref<4x8x128xf32, #tpu.memory_space<vmem>>, %arg8: memref<8x128xf32, #tpu.memory_space<vmem>>) attributes {dimension_semantics = [#tpu.dimension_semantics<parallel>, #tpu.dimension_semantics<arbitrary>], iteration_bounds = array<i64: 2, 1>, scalar_prefetch = 0 : i64, scratch_operands = 4 : i64, tpu.core_type = #tpu.core_type<tc>, window_params = [{transform_indices = @transform_0, window_bounds = array<i64: 1, 4, 16, 128>}, {transform_indices = @transform_1, window_bounds = array<i64: 1, 1, 16, 128>}, {transform_indices = @transform_2, window_bounds = array<i64: 1, 4, 4>}]} {
    %c0_i32 = arith.constant 0 : i32
    %0 = arith.cmpi eq, %arg1, %c0_i32 : i32
    %1 = arith.extui %0 : i1 to i32
    %c0_i32_0 = arith.constant 0 : i32
    %2 = arith.cmpi ne, %1, %c0_i32_0 : i32
    scf.if %2 {
      %cst_27 = arith.constant 0.000000e+00 : f32
      %23 = vector.broadcast %cst_27 : f32 to vector<4x8x128xf32>
      %c0_28 = arith.constant 0 : index
      %c0_29 = arith.constant 0 : index
      %c0_30 = arith.constant 0 : index
      %24 = vector.load %arg5[%c0_28, %c0_29, %c0_30] : memref<4x8x128xf32, #tpu.memory_space<vmem>>, vector<4x8x128xf32>
      tpu.vector_store %arg5[%c0_28, %c0_29, %c0_30], %23 {strides = array<i32>} : memref<4x8x128xf32, #tpu.memory_space<vmem>>, vector<4x8x128xf32>,
      %cst_31 = arith.constant 0.000000e+00 : f32
      %25 = vector.broadcast %cst_31 : f32 to vector<4x8x128xf32>
      %c0_32 = arith.constant 0 : index
      %c0_33 = arith.constant 0 : index
      %c0_34 = arith.constant 0 : index
      %26 = vector.load %arg6[%c0_32, %c0_33, %c0_34] : memref<4x8x128xf32, #tpu.memory_space<vmem>>, vector<4x8x128xf32>
      tpu.vector_store %arg6[%c0_32, %c0_33, %c0_34], %25 {strides = array<i32>} : memref<4x8x128xf32, #tpu.memory_space<vmem>>, vector<4x8x128xf32>,
      %cst_35 = arith.constant 0.000000e+00 : f32
      %27 = vector.broadcast %cst_35 : f32 to vector<4x8x128xf32>
      %c0_36 = arith.constant 0 : index
      %c0_37 = arith.constant 0 : index
      %c0_38 = arith.constant 0 : index
      %28 = vector.load %arg7[%c0_36, %c0_37, %c0_38] : memref<4x8x128xf32, #tpu.memory_space<vmem>>, vector<4x8x128xf32>
      tpu.vector_store %arg7[%c0_36, %c0_37, %c0_38], %27 {strides = array<i32>} : memref<4x8x128xf32, #tpu.memory_space<vmem>>, vector<4x8x128xf32>,
      %cst_39 = arith.constant 0.000000e+00 : f32
      %29 = vector.broadcast %cst_39 : f32 to vector<8x128xf32>
      %c0_40 = arith.constant 0 : index
      %c0_41 = arith.constant 0 : index
      %30 = vector.load %arg8[%c0_40, %c0_41] : memref<8x128xf32, #tpu.memory_space<vmem>>, vector<8x128xf32>
      tpu.vector_store %arg8[%c0_40, %c0_41], %29 {strides = array<i32>} : memref<8x128xf32, #tpu.memory_space<vmem>>, vector<8x128xf32>,
    } else {
    }
    %3 = tpu.iota {dimensions = array<i32: 0>} : vector<4x8x128xi32>
    %cst = arith.constant 0.000000e+00 : f32
    %4 = vector.broadcast %cst : f32 to vector<4x8x128xf32>
    %cst_1 = arith.constant 0.000000e+00 : f32
    %5 = vector.broadcast %cst_1 : f32 to vector<8x128xf32>
    %c0_i32_2 = arith.constant 0 : i32
    %c2_i32 = arith.constant 2 : i32
    %6 = arith.addi %c0_i32_2, %c2_i32 : i32
    %c1_i32 = arith.constant 1 : i32
    %7:4 = scf.for %arg9 = %c0_i32_2 to %6 step %c1_i32 iter_args(%arg10 = %4, %arg11 = %4, %arg12 = %4, %arg13 = %5) -> (vector<4x8x128xf32>, vector<4x8x128xf32>, vector<4x8x128xf32>, vector<8x128xf32>)  : i32 {
      %c8_i32 = arith.constant 8 : i32
      %23 = arith.muli %arg9, %c8_i32 : i32
      %24 = tpu.assume_multiple %23, 8 : i32
      %c0_27 = arith.constant 0 : index
      %c0_28 = arith.constant 0 : index
      %25 = arith.index_cast %24 : i32 to index
      %c0_29 = arith.constant 0 : index
      %26 = vector.load %arg2[%c0_27, %c0_28, %25, %c0_29] : memref<1x4x16x128xf32, #tpu.memory_space<vmem>>, vector<1x4x8x128xf32>
      %27 = vector.shape_cast %26 : vector<1x4x8x128xf32> to vector<4x8x128xf32>
      %c0_30 = arith.constant 0 : index
      %c0_31 = arith.constant 0 : index
      %28 = arith.index_cast %24 : i32 to index
      %c0_32 = arith.constant 0 : index
      %29 = vector.load %arg3[%c0_30, %c0_31, %28, %c0_32] : memref<1x1x16x128xi32, #tpu.memory_space<vmem>>, vector<1x1x8x128xi32>
      %30 = vector.shape_cast %29 : vector<1x1x8x128xi32> to vector<8x128xi32>
      %cst_33 = arith.constant dense<0xFF800000> : vector<8x128xf32>
      %31 = vector.multi_reduction <maximumf>, %27, %cst_33 [0] : vector<4x8x128xf32> to vector<8x128xf32>
      %32 = vector.shape_cast %31 : vector<8x128xf32> to vector<1x8x128xf32>
      %33 = vector.broadcast %32 : vector<1x8x128xf32> to vector<4x8x128xf32>
      %34 = arith.subf %27, %33 : vector<4x8x128xf32>
      %35 = math.exp %34 : vector<4x8x128xf32>
      %cst_34 = arith.constant dense<0.000000e+00> : vector<8x128xf32>
      %36 = vector.multi_reduction <add>, %35, %cst_34 [0] : vector<4x8x128xf32> to vector<8x128xf32>
      %37 = tpu.reciprocal %36 {approx = true} : vector<8x128xf32> -> vector<8x128xf32>
      %38 = arith.mulf %36, %37 : vector<8x128xf32>
      %cst_35 = arith.constant 2.000000e+00 : f32
      %39 = vector.broadcast %cst_35 : f32 to vector<8x128xf32>
      %40 = arith.subf %39, %38 : vector<8x128xf32>
      %41 = arith.mulf %37, %40 : vector<8x128xf32>
      %42 = math.log %36 : vector<8x128xf32>
      %43 = arith.addf %31, %42 : vector<8x128xf32>
      %44 = vector.shape_cast %30 : vector<8x128xi32> to vector<1x8x128xi32>
      %45 = vector.broadcast %44 : vector<1x8x128xi32> to vector<4x8x128xi32>
      %46 = arith.cmpi eq, %45, %3 : vector<4x8x128xi32>
      %47 = arith.extui %46 : vector<4x8x128xi1> to vector<4x8x128xi32>
      %48 = arith.sitofp %47 : vector<4x8x128xi32> to vector<4x8x128xf32>
      %49 = vector.shape_cast %41 : vector<8x128xf32> to vector<1x8x128xf32>
      %50 = vector.broadcast %49 : vector<1x8x128xf32> to vector<4x8x128xf32>
      %51 = arith.mulf %35, %50 : vector<4x8x128xf32>
      %52 = arith.mulf %48, %27 : vector<4x8x128xf32>
      %cst_36 = arith.constant dense<0.000000e+00> : vector<8x128xf32>
      %53 = vector.multi_reduction <add>, %52, %cst_36 [0] : vector<4x8x128xf32> to vector<8x128xf32>
      %54 = arith.mulf %51, %48 : vector<4x8x128xf32>
      %55 = arith.addf %arg10, %54 : vector<4x8x128xf32>
      %56 = arith.mulf %51, %51 : vector<4x8x128xf32>
      %57 = arith.addf %arg11, %56 : vector<4x8x128xf32>
      %58 = arith.addf %arg12, %48 : vector<4x8x128xf32>
      %59 = arith.subf %43, %53 : vector<8x128xf32>
      %60 = arith.addf %arg13, %59 : vector<8x128xf32>
      scf.yield %55, %57, %58, %60 : vector<4x8x128xf32>, vector<4x8x128xf32>, vector<4x8x128xf32>, vector<8x128xf32>
    }
    %c2_i32_3 = arith.constant 2 : i32
    %c0 = arith.constant 0 : index
    %c0_4 = arith.constant 0 : index
    %c0_5 = arith.constant 0 : index
    %8 = vector.load %arg5[%c0, %c0_4, %c0_5] : memref<4x8x128xf32, #tpu.memory_space<vmem>>, vector<4x8x128xf32>
    %9 = arith.addf %8, %7#0 : vector<4x8x128xf32>
    %c0_6 = arith.constant 0 : index
    %c0_7 = arith.constant 0 : index
    %c0_8 = arith.constant 0 : index
    %10 = vector.load %arg5[%c0_6, %c0_7, %c0_8] : memref<4x8x128xf32, #tpu.memory_space<vmem>>, vector<4x8x128xf32>
    tpu.vector_store %arg5[%c0_6, %c0_7, %c0_8], %9 {strides = array<i32>} : memref<4x8x128xf32, #tpu.memory_space<vmem>>, vector<4x8x128xf32>,
    %c0_9 = arith.constant 0 : index
    %c0_10 = arith.constant 0 : index
    %c0_11 = arith.constant 0 : index
    %11 = vector.load %arg6[%c0_9, %c0_10, %c0_11] : memref<4x8x128xf32, #tpu.memory_space<vmem>>, vector<4x8x128xf32>
    %12 = arith.addf %11, %7#1 : vector<4x8x128xf32>
    %c0_12 = arith.constant 0 : index
    %c0_13 = arith.constant 0 : index
    %c0_14 = arith.constant 0 : index
    %13 = vector.load %arg6[%c0_12, %c0_13, %c0_14] : memref<4x8x128xf32, #tpu.memory_space<vmem>>, vector<4x8x128xf32>
    tpu.vector_store %arg6[%c0_12, %c0_13, %c0_14], %12 {strides = array<i32>} : memref<4x8x128xf32, #tpu.memory_space<vmem>>, vector<4x8x128xf32>,
    %c0_15 = arith.constant 0 : index
    %c0_16 = arith.constant 0 : index
    %c0_17 = arith.constant 0 : index
    %14 = vector.load %arg7[%c0_15, %c0_16, %c0_17] : memref<4x8x128xf32, #tpu.memory_space<vmem>>, vector<4x8x128xf32>
    %15 = arith.addf %14, %7#2 : vector<4x8x128xf32>
    %c0_18 = arith.constant 0 : index
    %c0_19 = arith.constant 0 : index
    %c0_20 = arith.constant 0 : index
    %16 = vector.load %arg7[%c0_18, %c0_19, %c0_20] : memref<4x8x128xf32, #tpu.memory_space<vmem>>, vector<4x8x128xf32>
    tpu.vector_store %arg7[%c0_18, %c0_19, %c0_20], %15 {strides = array<i32>} : memref<4x8x128xf32, #tpu.memory_space<vmem>>, vector<4x8x128xf32>,
    %c0_21 = arith.constant 0 : index
    %c0_22 = arith.constant 0 : index
    %17 = vector.load %arg8[%c0_21, %c0_22] : memref<8x128xf32, #tpu.memory_space<vmem>>, vector<8x128xf32>
    %18 = arith.addf %17, %7#3 : vector<8x128xf32>
    %c0_23 = arith.constant 0 : index
    %c0_24 = arith.constant 0 : index
    %19 = vector.load %arg8[%c0_23, %c0_24] : memref<8x128xf32, #tpu.memory_space<vmem>>, vector<8x128xf32>
    tpu.vector_store %arg8[%c0_23, %c0_24], %18 {strides = array<i32>} : memref<8x128xf32, #tpu.memory_space<vmem>>, vector<8x128xf32>,
    %c0_i32_25 = arith.constant 0 : i32
    %20 = arith.cmpi eq, %arg1, %c0_i32_25 : i32
    %21 = arith.extui %20 : i1 to i32
    %c0_i32_26 = arith.constant 0 : i32
    %22 = arith.cmpi ne, %21, %c0_i32_26 : i32
    scf.if %22 {
      %c0_27 = arith.constant 0 : index
      %c0_28 = arith.constant 0 : index
      %c0_29 = arith.constant 0 : index
      %23 = vector.load %arg5[%c0_27, %c0_28, %c0_29] : memref<4x8x128xf32, #tpu.memory_space<vmem>>, vector<4x8x128xf32>
      %cst_30 = arith.constant dense<0.000000e+00> : vector<4x128xf32>
      %24 = vector.multi_reduction <add>, %23, %cst_30 [1] : vector<4x8x128xf32> to vector<4x128xf32>
      %cst_31 = arith.constant dense<0.000000e+00> : vector<4xf32>
      %25 = vector.multi_reduction <add>, %24, %cst_31 [1] : vector<4x128xf32> to vector<4xf32>
      %26 = vector.shape_cast %25 : vector<4xf32> to vector<4x1xf32>
      %c0_32 = arith.constant 0 : index
      %c0_33 = arith.constant 0 : index
      %c0_34 = arith.constant 0 : index
      %27 = vector.load %arg6[%c0_32, %c0_33, %c0_34] : memref<4x8x128xf32, #tpu.memory_space<vmem>>, vector<4x8x128xf32>
      %cst_35 = arith.constant dense<0.000000e+00> : vector<4x128xf32>
      %28 = vector.multi_reduction <add>, %27, %cst_35 [1] : vector<4x8x128xf32> to vector<4x128xf32>
      %cst_36 = arith.constant dense<0.000000e+00> : vector<4xf32>
      %29 = vector.multi_reduction <add>, %28, %cst_36 [1] : vector<4x128xf32> to vector<4xf32>
      %30 = vector.shape_cast %29 : vector<4xf32> to vector<4x1xf32>
      %c0_37 = arith.constant 0 : index
      %c0_38 = arith.constant 0 : index
      %c0_39 = arith.constant 0 : index
      %31 = vector.load %arg7[%c0_37, %c0_38, %c0_39] : memref<4x8x128xf32, #tpu.memory_space<vmem>>, vector<4x8x128xf32>
      %cst_40 = arith.constant dense<0.000000e+00> : vector<4x128xf32>
      %32 = vector.multi_reduction <add>, %31, %cst_40 [1] : vector<4x8x128xf32> to vector<4x128xf32>
      %cst_41 = arith.constant dense<0.000000e+00> : vector<4xf32>
      %33 = vector.multi_reduction <add>, %32, %cst_41 [1] : vector<4x128xf32> to vector<4xf32>
      %34 = vector.shape_cast %33 : vector<4xf32> to vector<4x1xf32>
      %c0_42 = arith.constant 0 : index
      %c0_43 = arith.constant 0 : index
      %35 = vector.load %arg8[%c0_42, %c0_43] : memref<8x128xf32, #tpu.memory_space<vmem>>, vector<8x128xf32>
      %cst_44 = arith.constant dense<0.000000e+00> : vector<128xf32>
      %36 = vector.multi_reduction <add>, %35, %cst_44 [0] : vector<8x128xf32> to vector<128xf32>
      %37 = vector.shape_cast %36 : vector<128xf32> to vector<1x128xf32>
      %cst_45 = arith.constant dense<0.000000e+00> : vector<1xf32>
      %38 = vector.multi_reduction <add>, %37, %cst_45 [1] : vector<1x128xf32> to vector<1xf32>
      %39 = vector.shape_cast %38 : vector<1xf32> to vector<1x1xf32>
      %40 = vector.shape_cast %39 : vector<1x1xf32> to vector<1x1xf32>
      %41 = vector.broadcast %40 : vector<1x1xf32> to vector<4x1xf32>
      %42 = tpu.concatenate %26, %30, %34, %41 in 1 : vector<4x1xf32>, vector<4x1xf32>, vector<4x1xf32>, vector<4x1xf32> -> vector<4x4xf32>
      %c0_46 = arith.constant 0 : index
      %c0_47 = arith.constant 0 : index
      %c0_48 = arith.constant 0 : index
      %43 = vector.load %arg4[%c0_46, %c0_47, %c0_48] : memref<1x4x4xf32, #tpu.memory_space<vmem>>, vector<1x4x4xf32>
      %44 = vector.shape_cast %43 : vector<1x4x4xf32> to vector<4x4xf32>
      %45 = vector.shape_cast %42 : vector<4x4xf32> to vector<1x4x4xf32>
      tpu.vector_store %arg4[%c0_46, %c0_47, %c0_48], %45 {strides = array<i32>} : memref<1x4x4xf32, #tpu.memory_space<vmem>>, vector<1x4x4xf32>,
    } else {
    }
    return
  }
  func.func @transform_0(%arg0: i32, %arg1: i32) -> (i32, i32, i32, i32) {
    %c0_i32 = arith.constant 0 : i32
    %c0_i32_0 = arith.constant 0 : i32
    %c0_i32_1 = arith.constant 0 : i32
    return %arg0, %c0_i32, %arg1, %c0_i32_0 : i32, i32, i32, i32
  }
  func.func @transform_1(%arg0: i32, %arg1: i32) -> (i32, i32, i32, i32) {
    %c0_i32 = arith.constant 0 : i32
    %c0_i32_0 = arith.constant 0 : i32
    %c0_i32_1 = arith.constant 0 : i32
    return %arg0, %c0_i32, %arg1, %c0_i32_0 : i32, i32, i32, i32
  }
  func.func @transform_2(%arg0: i32, %arg1: i32) -> (i32, i32, i32) {
    %c0_i32 = arith.constant 0 : i32
    %c0_i32_0 = arith.constant 0 : i32
    %c0_i32_1 = arith.constant 0 : i32
    return %arg0, %c0_i32, %c0_i32_0 : i32, i32, i32
  }
}

</mosaic_0001>

<llo_original>
// kernel: tpu_custom_call.1
$region0: #{tpu_custom_call.1}
  #allocation0 [shape = 'u32[]', space=smem, size = 0x4, offset = 0x4, fixed_abs, tag = 'smem constant byte address 0x4 - core index']
  #allocation1 [shape = 'u32[72,128]{1,0:T(1,128)}', space=vmem, size = 0x9000, scoped, tag = 'internal scratch']
  #allocation2 [shape = 'f32[4,8,128]{2,1,0:T(8,128)}', space=vmem, size = 0x4000, scoped, tag = 'scratch operand']
  #allocation3 [shape = 'f32[4,8,128]{2,1,0:T(8,128)}', space=vmem, size = 0x4000, scoped, tag = 'scratch operand']
  #allocation4 [shape = 'f32[4,8,128]{2,1,0:T(8,128)}', space=vmem, size = 0x4000, scoped, tag = 'scratch operand']
  #allocation5 [shape = 'f32[8,128]{1,0:T(8,128)}', space=vmem, size = 0x1000, scoped, tag = 'scratch operand']
  %s0 = inlined_call_operand.hbm [shape: f32[2,4,16,128], index: 0, kind: input, shape index: {}]
  %s1 = inlined_call_operand.hbm [shape: s32[2,1,16,128], index: 1, kind: input, shape index: {}]
  %s2 = inlined_call_operand.hbm [shape: f32[2,4,4], index: 2, kind: output, shape index: {}]
  %s3 = sld [smem:[#allocation0]]
  $region64: #{tpu_custom_call.1} parent=0
    _
  %s5 = ssub.s32 1, %s3
  %s6 = scalar_select 0, %s5, %s3
  $region1: #{tpu_custom_call.1} parent=0
    #allocation6 [shape = 'u8[65536]{0}', space=vmem, size = 0x10000, scoped, tag = 'input window, operand 0']
    #allocation7 [shape = 's32[2]{0}', space=sflag, size = 0x8, scoped, tag = 'scoped memory for tpu_custom_call.1']
    #allocation8 [shape = 's32[2]{0}', space=sflag, size = 0x8, scoped, tag = 'scoped memory for tpu_custom_call.1']
    #allocation9 [shape = 'u8[16384]{0}', space=vmem, size = 0x4000, scoped, tag = 'input window, operand 1']
    #allocation10 [shape = 's32[2]{0}', space=sflag, size = 0x8, scoped, tag = 'scoped memory for tpu_custom_call.1']
    #allocation11 [shape = 'u8[4096]{0}', space=vmem, size = 0x1000, scoped, tag = 'output window, operand 0']
    %7 = vsyncpa [#allocation7], 0
    %s8 = scalar_lea.sflag [#allocation7], 1
    %9 = vsyncpa %s8, 0
    %10 = vsyncpa [#allocation10], 0
    %s11 = scalar_lea.sflag [#allocation10], 1
    %12 = vsyncpa %s11, 0
    %13 = vsyncpa [#allocation8], 0
    %s14 = scalar_lea.sflag [#allocation8], 1
    %15 = vsyncpa %s14, 0
    loop: start=0, step=1, limit=4
    $region2: #{tpu_custom_call.1} parent=1 // loop_pre_header
      _
    $region3: #{tpu_custom_call.1} parent=1 // loop_header
      %s17 = sphi 0, %s21
      %p18 = scmp.ge.s32.totalorder %s17, 4
      %s24 = sphi 0, %s36
      %s25 = sphi 0, %s32
      %s26 = sphi 0, %s24
      %s27 = sphi 0, %s25
      %s28 = sphi 0, %s26
      %s29 = sphi 0, %s27
      %s41 = sphi 0, %s43
      %s44 = sphi 0, %s41
      %s45 = sphi 0, %s44
      %s61 = sphi 0, %s45
      %s69 = sphi 0, %s71
      %s72 = sphi 0, %s69
      %s73 = sphi 0, %s72
      %s89 = sphi 0, %s73
      %s95 = sphi 0, %s97
      %s98 = sphi 0, %s95
      %s99 = sphi 0, %s98
      %s115 = sphi 0, %s99
    $region4: #{tpu_custom_call.1} parent=1 // loop_header_branch
      %20 = sbr.rel (%p18) target = $region8
    $region5: #{tpu_custom_call.1} parent=1 // loop_body
      %s22 = ssub.s32 %s17, 1
      %s23 = ssub.s32 %s17, 2
      %s30 = sadd.s32 1, %s25
      %p31 = scmp.ge.s32.totalorder %s30, 1
      %s32 = scalar_select %p31, 0, %s30
      %s33 = sadd.s32 1, %s24
      %s34 = scalar_select %p31, %s33, %s24
      %p35 = scmp.ge.s32.totalorder %s34, 2
      %s36 = scalar_select %p35, 0, %s34
      %s37 = ssub.s32 %s24, %s36
      %s38 = ssub.s32 %s25, %s32
      %s39 = sor.u32 %s37, %s38
      %p40 = scmp.eq.s32.totalorder %s39, 0
      %s42 = sadd.s32 %s41, 1
      %s43 = scalar_select %p40, %s41, %s42
      %p46 = pneg %p40
      %p47 = scmp.eq.s32.totalorder %s17, 1
      %p48 = por %p46, %p47
      %p49 = scmp.ne.s32.totalorder %s41, %s44
      %p50 = scmp.eq.s32.totalorder %s17, 0
      %p51 = por %p49, %p50
      %p52 = scmp.ne.s32.totalorder %s41, %s44
      %p53 = scmp.eq.s32.totalorder %s22, 1
      %p54 = por %p52, %p53
      %p55 = scmp.ne.s32.totalorder %s44, %s45
      %p56 = scmp.eq.s32.totalorder %s22, 0
      %p57 = por %p55, %p56
      %p58 = scmp.ne.s32.totalorder %s44, %s45
      %p59 = scmp.eq.s32.totalorder %s23, 1
      %p60 = por %p58, %p59
      %p62 = scmp.ne.s32.totalorder %s45, %s61
      %p63 = scmp.eq.s32.totalorder %s23, 0
      %p64 = por %p62, %p63
      %s65 = ssub.s32 %s24, %s36
      %s66 = ssub.s32 %s25, %s32
      %s67 = sor.u32 %s65, %s66
      %p68 = scmp.eq.s32.totalorder %s67, 0
      %s70 = sadd.s32 %s69, 1
      %s71 = scalar_select %p68, %s69, %s70
      %p74 = pneg %p68
      %p75 = scmp.eq.s32.totalorder %s17, 1
      %p76 = por %p74, %p75
      %p77 = scmp.ne.s32.totalorder %s69, %s72
      %p78 = scmp.eq.s32.totalorder %s17, 0
      %p79 = por %p77, %p78
      %p80 = scmp.ne.s32.totalorder %s69, %s72
      %p81 = scmp.eq.s32.totalorder %s22, 1
      %p82 = por %p80, %p81
      %p83 = scmp.ne.s32.totalorder %s72, %s73
      %p84 = scmp.eq.s32.totalorder %s22, 0
      %p85 = por %p83, %p84
      %p86 = scmp.ne.s32.totalorder %s72, %s73
      %p87 = scmp.eq.s32.totalorder %s23, 1
      %p88 = por %p86, %p87
      %p90 = scmp.ne.s32.totalorder %s73, %s89
      %p91 = scmp.eq.s32.totalorder %s23, 0
      %p92 = por %p90, %p91
      %s93 = ssub.s32 %s24, %s36
      %p94 = scmp.eq.s32.totalorder %s93, 0
      %s96 = sadd.s32 %s95, 1
      %s97 = scalar_select %p94, %s95, %s96
      %p100 = pneg %p94
      %p101 = scmp.eq.s32.totalorder %s17, 1
      %p102 = por %p100, %p101
      %p103 = scmp.ne.s32.totalorder %s95, %s98
      %p104 = scmp.eq.s32.totalorder %s17, 0
      %p105 = por %p103, %p104
      %p106 = scmp.ne.s32.totalorder %s95, %s98
      %p107 = scmp.eq.s32.totalorder %s22, 1
      %p108 = por %p106, %p107
      %p109 = scmp.ne.s32.totalorder %s98, %s99
      %p110 = scmp.eq.s32.totalorder %s22, 0
      %p111 = por %p109, %p110
      %p112 = scmp.ne.s32.totalorder %s98, %s99
      %p113 = scmp.eq.s32.totalorder %s23, 1
      %p114 = por %p112, %p113
      %p116 = scmp.ne.s32.totalorder %s99, %s115
      %p117 = scmp.eq.s32.totalorder %s23, 0
      %p118 = por %p116, %p117
      %p119 = scmp.le.s32.totalorder 1, %s17
      %p120 = scmp.lt.s32.totalorder %s17, 3
      %p121 = pnand %p119, %p120
      %p122 = pneg %p121
      // Predicated region
      $region9: #{tpu_custom_call.1} parent=5 // pred_check
        _
      $region10: #{tpu_custom_call.1} parent=5 // pred_check_branch
        %124 = sbr.rel (%p121) target = $region12
      $region11: #{tpu_custom_call.1} parent=5 // pred_region
        %s125 = ssub.s32 %s17, 1
      $region12: #{tpu_custom_call.1} parent=5 // pred_fallthru
        _
      %p126 = scmp.lt.s32.totalorder %s17, 2
      // Predicated region
      $region13: #{tpu_custom_call.1} parent=5 // pred_check
        %p127 = pneg %p126
      $region14: #{tpu_custom_call.1} parent=5 // pred_check_branch
        %129 = sbr.rel (%p127) target = $region16
      $region15: #{tpu_custom_call.1} parent=5 // pred_region
        // Predicated region
        $region17: #{tpu_custom_call.1} parent=15 // pred_check
          %p130 = pneg %p51
        $region18: #{tpu_custom_call.1} parent=15 // pred_check_branch
          %132 = sbr.rel (%p130) target = $region20
        $region19: #{tpu_custom_call.1} parent=15 // pred_region
          %s133 = sand.u32 %s41, 1
          %s134 = scalar_lea.sflag [#allocation7], %s133
          %s135 = sand.u32 %s41, 1
          %s136 = smul.addr %s135, 64
          %s137 = scalar_lea.vmem [#allocation6], %s136
          %s138 = smul.u32 2, %s25
          %140 = vsyncadd %s134, 0
          %s141 = smul.addr %s24, 8
          %s142 = sadd.s32 %s138, %s141
          %s143 = smul.addr %s142, 8
          %s144 = scalar_lea.hbm %s0, %s143
          %s145 = sshll.u32 %s144, 4
          %s146 = int_to_ptr.hbm [resolvable:$true] %s145
          %s147 = sshll.u32 %s137, 4
          %s148 = int_to_ptr.vmem [resolvable:$true] %s147
          %153 = dma.hbm_to_vmem [thread:$0]  %s146, 1024, %s148, %s134, 128, 128, 8
        $region20: #{tpu_custom_call.1} parent=15 // pred_fallthru
          _
        // Predicated region
        $region21: #{tpu_custom_call.1} parent=15 // pred_check
          %p154 = pneg %p79
        $region22: #{tpu_custom_call.1} parent=15 // pred_check_branch
          %156 = sbr.rel (%p154) target = $region24
        $region23: #{tpu_custom_call.1} parent=15 // pred_region
          %s157 = sand.u32 %s69, 1
          %s158 = scalar_lea.sflag [#allocation10], %s157
          %s159 = sand.u32 %s69, 1
          %s160 = smul.addr %s159, 16
          %s161 = scalar_lea.vmem [#allocation9], %s160
          %s162 = smul.u32 2, %s25
          %164 = vsyncadd %s158, 0
          %s165 = smul.addr %s24, 2
          %s166 = sadd.s32 %s162, %s165
          %s167 = smul.addr %s166, 8
          %s168 = scalar_lea.hbm %s1, %s167
          %s169 = sshll.u32 %s168, 4
          %s170 = int_to_ptr.hbm [resolvable:$true] %s169
          %s171 = sshll.u32 %s161, 4
          %s172 = int_to_ptr.vmem [resolvable:$true] %s171
          %177 = dma.hbm_to_vmem [thread:$0]  %s170, 256, %s172, %s158, 128, 128, 8
        $region24: #{tpu_custom_call.1} parent=15 // pred_fallthru
          _
      $region16: #{tpu_custom_call.1} parent=5 // pred_fallthru
        _
      %p178 = scmp.le.s32.totalorder 1, %s17
      %p179 = scmp.lt.s32.totalorder %s17, 3
      %p180 = pnand %p178, %p179
      %p181 = pneg %p180
      // Predicated region
      $region25: #{tpu_custom_call.1} parent=5 // pred_check
        _
      $region26: #{tpu_custom_call.1} parent=5 // pred_check_branch
        %183 = sbr.rel (%p180) target = $region28
      $region27: #{tpu_custom_call.1} parent=5 // pred_region
        %s184 = ssub.s32 %s17, 1
        %s185 = sand.u32 %s44, 1
        %s186 = scalar_lea.sflag [#allocation7], %s185
        %s187 = sand.u32 %s44, 1
        %s188 = smul.addr %s187, 64
        %s189 = scalar_lea.vmem [#allocation6], %s188
        // Predicated region
        $region29: #{tpu_custom_call.1} parent=27 // pred_check
          %p190 = pneg %p57
        $region30: #{tpu_custom_call.1} parent=27 // pred_check_branch
          %192 = sbr.rel (%p190) target = $region32
        $region31: #{tpu_custom_call.1} parent=27 // pred_region
          %194 = dma.done %s186, 1024
        $region32: #{tpu_custom_call.1} parent=27 // pred_fallthru
          _
        %s195 = sand.u32 %s72, 1
        %s196 = scalar_lea.sflag [#allocation10], %s195
        %s197 = sand.u32 %s72, 1
        %s198 = smul.addr %s197, 16
        %s199 = scalar_lea.vmem [#allocation9], %s198
        // Predicated region
        $region33: #{tpu_custom_call.1} parent=27 // pred_check
          %p200 = pneg %p85
        $region34: #{tpu_custom_call.1} parent=27 // pred_check_branch
          %202 = sbr.rel (%p200) target = $region36
        $region35: #{tpu_custom_call.1} parent=27 // pred_region
          %204 = dma.done %s196, 256
        $region36: #{tpu_custom_call.1} parent=27 // pred_fallthru
          _
        %s205 = sand.u32 %s44, 1
        %s206 = scalar_lea.sflag [#allocation7], %s205
        %s207 = sand.u32 %s44, 1
        %s208 = smul.addr %s207, 64
        %s209 = scalar_lea.vmem [#allocation6], %s208
        %p210 = pneg %p57
        %p211 = pneg %p54
        %s212 = sand.u32 %s72, 1
        %s213 = scalar_lea.sflag [#allocation10], %s212
        %s214 = sand.u32 %s72, 1
        %s215 = smul.addr %s214, 16
        %s216 = scalar_lea.vmem [#allocation9], %s215
        %p217 = pneg %p85
        %p218 = pneg %p82
        %p219 = pneg %p111
        %p220 = pneg %p108
        %s221 = sand.u32 %s98, 1
        %s222 = scalar_lea.sflag [#allocation8], %s221
        %s223 = sand.u32 %s98, 1
        %s224 = smul.addr %s223, 4
        %s225 = scalar_lea.vmem [#allocation11], %s224
        %s226 = smul.u32 2, %s27
        %s227 = smul.u32 2, %s27
        %p228 = scmp.eq.s32.totalorder %s27, 0
        // Predicated region
        $region37: #{tpu_custom_call.1} parent=27 // pred_check
          %p229 = pneg %p228
        $region38: #{tpu_custom_call.1} parent=27 // pred_check_branch
          %231 = sbr.rel (%p229) target = $region40
        $region39: #{tpu_custom_call.1} parent=27 // pred_region
          %232 = vst [vmem:[#allocation2] sm:$0xff] 0.0
          %233 = vst [vmem:[#allocation2 + $0x8] sm:$0xff] 0.0
          %234 = vst [vmem:[#allocation2 + $0x10] sm:$0xff] 0.0
          %235 = vst [vmem:[#allocation2 + $0x18] sm:$0xff] 0.0
          %236 = vst [vmem:[#allocation3] sm:$0xff] 0.0
          %237 = vst [vmem:[#allocation3 + $0x8] sm:$0xff] 0.0
          %238 = vst [vmem:[#allocation3 + $0x10] sm:$0xff] 0.0
          %239 = vst [vmem:[#allocation3 + $0x18] sm:$0xff] 0.0
          %240 = vst [vmem:[#allocation4] sm:$0xff] 0.0
          %241 = vst [vmem:[#allocation4 + $0x8] sm:$0xff] 0.0
          %242 = vst [vmem:[#allocation4 + $0x10] sm:$0xff] 0.0
          %243 = vst [vmem:[#allocation4 + $0x18] sm:$0xff] 0.0
          %244 = vst [vmem:[#allocation5] sm:$0xff] 0.0
        $region40: #{tpu_custom_call.1} parent=27 // pred_fallthru
          _
        loop: start=0, step=1, limit=2
        $region41: #{tpu_custom_call.1} parent=27 // loop_pre_header
          _
        $region42: #{tpu_custom_call.1} parent=27 // loop_header
          %s246 = sphi 0, %s250
          %p247 = scmp.ge.s32.totalorder %s246, 2
          %v251 = vphi 0.0, %v324
          %v252 = vphi 0.0, %v325
          %v253 = vphi 0.0, %v326
          %v254 = vphi 0.0, %v327
          %v255 = vphi 0.0, %v332
          %v256 = vphi 0.0, %v333
          %v257 = vphi 0.0, %v334
          %v258 = vphi 0.0, %v335
          %v259 = vphi 0.0, %v336
          %v260 = vphi 0.0, %v337
          %v261 = vphi 0.0, %v338
          %v262 = vphi 0.0, %v339
          %v263 = vphi 0.0, %v341
        $region43: #{tpu_custom_call.1} parent=27 // loop_header_branch
          %249 = sbr.rel (%p247) target = $region47
        $region44: #{tpu_custom_call.1} parent=27 // loop_body
          %s264 = smul.u32 %s246, 8
          %s265 = scalar_lea.vmem %s189, %s264 [#allocation6]
          %v266 = vld [vmem:[%s265] sm:$0xff]
          %v267 = vld [vmem:[%s265 + $0x10] sm:$0xff]
          %v268 = vld [vmem:[%s265 + $0x20] sm:$0xff]
          %v269 = vld [vmem:[%s265 + $0x30] sm:$0xff]
          %s270 = scalar_lea.vmem %s199, %s264 [#allocation9]
          %v271 = vld [vmem:[%s270] sm:$0xff]
          %v272 = vmax.f32 %v266, %v267
          %v273 = vmax.f32 %v268, %v269
          %v274 = vmax.f32 %v272, %v273
          %v275 = vsub.f32 %v266, %v274
          %v276 = vsub.f32 %v267, %v274
          %v277 = vsub.f32 %v268, %v274
          %v278 = vsub.f32 %v269, %v274
          %v279 = vmul.f32 %v275, 1.442695
          %v280 = vpow.pop %v279
          %v281 = vmul.f32 %v276, 1.442695
          %v282 = vpow.pop %v281
          %v283 = vmul.f32 %v277, 1.442695
          %v284 = vpow.pop %v283
          %v285 = vmul.f32 %v278, 1.442695
          %v286 = vpow.pop %v285
          %v287 = vadd.f32 %v280, %v282
          %v288 = vadd.f32 %v287, %v284
          %v289 = vadd.f32 %v288, %v286
          %v290 = vrcp.pop %v289
          %v291 = vmul.f32 %v289, %v290
          %v292 = vsub.f32 2.0, %v291
          %v293 = vmul.f32 %v290, %v292
          %v294 = vlog2.pop %v289
          %v295 = vmul.f32 %v294, 0.6931472
          %v296 = vadd.f32 %v274, %v295
          %vm297 = vcmp.eq.s32.totalorder %v271, 0
          %vm298 = vcmp.eq.s32.totalorder %v271, 1
          %vm299 = vcmp.eq.s32.totalorder %v271, 2
          %vm300 = vcmp.eq.s32.totalorder %v271, 3
          %v301 = vsel %vm297, 1, 0
          %v302 = vsel %vm298, 1, 0
          %v303 = vsel %vm299, 1, 0
          %v304 = vsel %vm300, 1, 0
          %v305 = vcvt.s32.f32 %v301
          %v306 = vcvt.s32.f32 %v302
          %v307 = vcvt.s32.f32 %v303
          %v308 = vcvt.s32.f32 %v304
          %v309 = vmul.f32 %v280, %v293
          %v310 = vmul.f32 %v282, %v293
          %v311 = vmul.f32 %v284, %v293
          %v312 = vmul.f32 %v286, %v293
          %v313 = vmul.f32 %v305, %v266
          %v314 = vmul.f32 %v306, %v267
          %v315 = vmul.f32 %v307, %v268
          %v316 = vmul.f32 %v308, %v269
          %v317 = vadd.f32 %v313, %v314
          %v318 = vadd.f32 %v317, %v315
          %v319 = vadd.f32 %v318, %v316
          %v320 = vmul.f32 %v309, %v305
          %v321 = vmul.f32 %v310, %v306
          %v322 = vmul.f32 %v311, %v307
          %v323 = vmul.f32 %v312, %v308
          %v324 = vadd.f32 %v251, %v320
          %v325 = vadd.f32 %v252, %v321
          %v326 = vadd.f32 %v253, %v322
          %v327 = vadd.f32 %v254, %v323
          %v328 = vmul.f32 %v309, %v309
          %v329 = vmul.f32 %v310, %v310
          %v330 = vmul.f32 %v311, %v311
          %v331 = vmul.f32 %v312, %v312
          %v332 = vadd.f32 %v255, %v328
          %v333 = vadd.f32 %v256, %v329
          %v334 = vadd.f32 %v257, %v330
          %v335 = vadd.f32 %v258, %v331
          %v336 = vadd.f32 %v259, %v305
          %v337 = vadd.f32 %v260, %v306
          %v338 = vadd.f32 %v261, %v307
          %v339 = vadd.f32 %v262, %v308
          %v340 = vsub.f32 %v296, %v319
          %v341 = vadd.f32 %v263, %v340
        $region45: #{tpu_custom_call.1} parent=27 // loop_footer
          %s250 = sadd.s32 1, %s246
        $region46: #{tpu_custom_call.1} parent=27 // loop_footer_branch
          %245 = sbr.rel target = $region42
        $region47: #{tpu_custom_call.1} parent=27 // loop_exit
          _
        %v342 = vld [vmem:[#allocation2] sm:$0xff]
        %v343 = vld [vmem:[#allocation2 + $0x8] sm:$0xff]
        %v344 = vld [vmem:[#allocation2 + $0x10] sm:$0xff]
        %v345 = vld [vmem:[#allocation2 + $0x18] sm:$0xff]
        %v346 = vadd.f32 %v342, %v251
        %v347 = vadd.f32 %v343, %v252
        %v348 = vadd.f32 %v344, %v253
        %v349 = vadd.f32 %v345, %v254
        %350 = vst [vmem:[#allocation2] sm:$0xff] %v346
        %351 = vst [vmem:[#allocation2 + $0x8] sm:$0xff] %v347
        %352 = vst [vmem:[#allocation2 + $0x10] sm:$0xff] %v348
        %353 = vst [vmem:[#allocation2 + $0x18] sm:$0xff] %v349
        %v354 = vld [vmem:[#allocation3] sm:$0xff]
        %v355 = vld [vmem:[#allocation3 + $0x8] sm:$0xff]
        %v356 = vld [vmem:[#allocation3 + $0x10] sm:$0xff]
        %v357 = vld [vmem:[#allocation3 + $0x18] sm:$0xff]
        %v358 = vadd.f32 %v354, %v255
        %v359 = vadd.f32 %v355, %v256
        %v360 = vadd.f32 %v356, %v257
        %v361 = vadd.f32 %v357, %v258
        %362 = vst [vmem:[#allocation3] sm:$0xff] %v358
        %363 = vst [vmem:[#allocation3 + $0x8] sm:$0xff] %v359
        %364 = vst [vmem:[#allocation3 + $0x10] sm:$0xff] %v360
        %365 = vst [vmem:[#allocation3 + $0x18] sm:$0xff] %v361
        %v366 = vld [vmem:[#allocation4] sm:$0xff]
        %v367 = vld [vmem:[#allocation4 + $0x8] sm:$0xff]
        %v368 = vld [vmem:[#allocation4 + $0x10] sm:$0xff]
        %v369 = vld [vmem:[#allocation4 + $0x18] sm:$0xff]
        %v370 = vadd.f32 %v366, %v259
        %v371 = vadd.f32 %v367, %v260
        %v372 = vadd.f32 %v368, %v261
        %v373 = vadd.f32 %v369, %v262
        %374 = vst [vmem:[#allocation4] sm:$0xff] %v370
        %375 = vst [vmem:[#allocation4 + $0x8] sm:$0xff] %v371
        %376 = vst [vmem:[#allocation4 + $0x10] sm:$0xff] %v372
        %377 = vst [vmem:[#allocation4 + $0x18] sm:$0xff] %v373
        %v378 = vld [vmem:[#allocation5] sm:$0xff]
        %v379 = vadd.f32 %v378, %v263
        %380 = vst [vmem:[#allocation5] sm:$0xff] %v379
        // Predicated region
        $region48: #{tpu_custom_call.1} parent=27 // pred_check
          %p381 = pneg %p228
        $region49: #{tpu_custom_call.1} parent=27 // pred_check_branch
          %383 = sbr.rel (%p381) target = $region51
        $region50: #{tpu_custom_call.1} parent=27 // pred_region
          %v384 = vld [vmem:[#allocation2] sm:$0xff]
          %v385 = vld [vmem:[#allocation2 + $0x8] sm:$0xff]
          %v386 = vld [vmem:[#allocation2 + $0x10] sm:$0xff]
          %v387 = vld [vmem:[#allocation2 + $0x18] sm:$0xff]
          %v388 = vrot.slane %v384, 4
          %v389 = vadd.f32 %v384, %v388
          %v390 = vrot.slane %v389, 2
          %v391 = vadd.f32 %v389, %v390
          %v392 = vrot.slane %v391, 1
          %v393 = vadd.f32 %v391, %v392
          %v394 = vrot.slane %v385, 4
          %v395 = vadd.f32 %v385, %v394
          %v396 = vrot.slane %v395, 2
          %v397 = vadd.f32 %v395, %v396
          %v398 = vrot.slane %v397, 1
          %v399 = vadd.f32 %v397, %v398
          %v400 = vrot.slane %v386, 4
          %v401 = vadd.f32 %v386, %v400
          %v402 = vrot.slane %v401, 2
          %v403 = vadd.f32 %v401, %v402
          %v404 = vrot.slane %v403, 1
          %v405 = vadd.f32 %v403, %v404
          %v406 = vrot.slane %v387, 4
          %v407 = vadd.f32 %v387, %v406
          %v408 = vrot.slane %v407, 2
          %v409 = vadd.f32 %v407, %v408
          %v410 = vrot.slane %v409, 1
          %v411 = vadd.f32 %v409, %v410
          %vm416 = vcmask 1041409
          %v417 = vsel %vm416, %v399, %v393
          %vm418 = vcmask 1042434
          %v419 = vsel %vm418, %v405, %v417
          %vm420 = vcmask 1043459
          %v421 = vsel %vm420, %v411, %v419
          %vm423 = vcmask 1043456
          %v424 = vsel %vm423, %v421, 0.0
          %425 = vadd.xlane.f32.xlu0 %v424
          %v426 = vpop.xlane.xlu0 %425
          %v427 = vld [vmem:[#allocation3] sm:$0xff]
          %v428 = vld [vmem:[#allocation3 + $0x8] sm:$0xff]
          %v429 = vld [vmem:[#allocation3 + $0x10] sm:$0xff]
          %v430 = vld [vmem:[#allocation3 + $0x18] sm:$0xff]
          %v431 = vrot.slane %v427, 4
          %v432 = vadd.f32 %v427, %v431
          %v433 = vrot.slane %v432, 2
          %v434 = vadd.f32 %v432, %v433
          %v435 = vrot.slane %v434, 1
          %v436 = vadd.f32 %v434, %v435
          %v437 = vrot.slane %v428, 4
          %v438 = vadd.f32 %v428, %v437
          %v439 = vrot.slane %v438, 2
          %v440 = vadd.f32 %v438, %v439
          %v441 = vrot.slane %v440, 1
          %v442 = vadd.f32 %v440, %v441
          %v443 = vrot.slane %v429, 4
          %v444 = vadd.f32 %v429, %v443
          %v445 = vrot.slane %v444, 2
          %v446 = vadd.f32 %v444, %v445
          %v447 = vrot.slane %v446, 1
          %v448 = vadd.f32 %v446, %v447
          %v449 = vrot.slane %v430, 4
          %v450 = vadd.f32 %v430, %v449
          %v451 = vrot.slane %v450, 2
          %v452 = vadd.f32 %v450, %v451
          %v453 = vrot.slane %v452, 1
          %v454 = vadd.f32 %v452, %v453
          %v459 = vsel %vm416, %v442, %v436
          %v460 = vsel %vm418, %v448, %v459
          %v461 = vsel %vm420, %v454, %v460
          %v463 = vsel %vm423, %v461, 0.0
          %464 = vadd.xlane.f32.xlu0 %v463
          %v465 = vpop.xlane.xlu0 %464
          %v466 = vld [vmem:[#allocation4] sm:$0xff]
          %v467 = vld [vmem:[#allocation4 + $0x8] sm:$0xff]
          %v468 = vld [vmem:[#allocation4 + $0x10] sm:$0xff]
          %v469 = vld [vmem:[#allocation4 + $0x18] sm:$0xff]
          %v470 = vrot.slane %v466, 4
          %v471 = vadd.f32 %v466, %v470
          %v472 = vrot.slane %v471, 2
          %v473 = vadd.f32 %v471, %v472
          %v474 = vrot.slane %v473, 1
          %v475 = vadd.f32 %v473, %v474
          %v476 = vrot.slane %v467, 4
          %v477 = vadd.f32 %v467, %v476
          %v478 = vrot.slane %v477, 2
          %v479 = vadd.f32 %v477, %v478
          %v480 = vrot.slane %v479, 1
          %v481 = vadd.f32 %v479, %v480
          %v482 = vrot.slane %v468, 4
          %v483 = vadd.f32 %v468, %v482
          %v484 = vrot.slane %v483, 2
          %v485 = vadd.f32 %v483, %v484
          %v486 = vrot.slane %v485, 1
          %v487 = vadd.f32 %v485, %v486
          %v488 = vrot.slane %v469, 4
          %v489 = vadd.f32 %v469, %v488
          %v490 = vrot.slane %v489, 2
          %v491 = vadd.f32 %v489, %v490
          %v492 = vrot.slane %v491, 1
          %v493 = vadd.f32 %v491, %v492
          %v498 = vsel %vm416, %v481, %v475
          %v499 = vsel %vm418, %v487, %v498
          %v500 = vsel %vm420, %v493, %v499
          %v502 = vsel %vm423, %v500, 0.0
          %503 = vadd.xlane.f32.xlu0 %v502
          %v504 = vpop.xlane.xlu0 %503
          %v505 = vld [vmem:[#allocation5] sm:$0xff]
          %v506 = vrot.slane %v505, 4
          %v507 = vadd.f32 %v505, %v506
          %v508 = vrot.slane %v507, 2
          %v509 = vadd.f32 %v507, %v508
          %v510 = vrot.slane %v509, 1
          %v511 = vadd.f32 %v509, %v510
          %512 = vadd.xlane.f32.xlu0 %v511
          %v513 = vpop.xlane.xlu0 %512
          %vm514 = vcmask 7168
          %v515 = vsel %vm514, %v426, %v465
          %vm516 = vcmask 15360
          %v517 = vsel %vm516, %v515, %v504
          %vm518 = vcmask 23552
          %v519 = vsel %vm518, %v517, %v513
          %vm520 = vcmask 27648
          %521 = vst.msk [vmem:[%s225] sm:$0xf] %vm520, %v519
        $region51: #{tpu_custom_call.1} parent=27 // pred_fallthru
          _
        %s522 = sand.u32 %s98, 1
        %s523 = scalar_lea.sflag [#allocation8], %s522
        %s524 = sand.u32 %s98, 1
        %s525 = smul.addr %s524, 4
        %s526 = scalar_lea.vmem [#allocation11], %s525
        // Predicated region
        $region52: #{tpu_custom_call.1} parent=27 // pred_check
          %p527 = pneg %p108
        $region53: #{tpu_custom_call.1} parent=27 // pred_check_branch
          %529 = sbr.rel (%p527) target = $region55
        $region54: #{tpu_custom_call.1} parent=27 // pred_region
          %531 = vsyncadd %s523, 0
          %s532 = smul.addr %s26, 4
          %s533 = scalar_lea.hbm %s2, %s532
          %s535 = sshll.u32 %s526, 4
          %s536 = int_to_ptr.vmem [resolvable:$true] %s535
          %s537 = sshll.u32 %s533, 4
          %s538 = int_to_ptr.hbm [resolvable:$true] %s537
          %540 = dma.vmem_to_hbm [thread:$0]  %s536, 64, %s538, %s523
        $region55: #{tpu_custom_call.1} parent=27 // pred_fallthru
          _
      $region28: #{tpu_custom_call.1} parent=5 // pred_fallthru
        _
      %p541 = scmp.le.s32.totalorder 2, %s17
      // Predicated region
      $region56: #{tpu_custom_call.1} parent=5 // pred_check
        %p542 = pneg %p541
      $region57: #{tpu_custom_call.1} parent=5 // pred_check_branch
        %544 = sbr.rel (%p542) target = $region59
      $region58: #{tpu_custom_call.1} parent=5 // pred_region
        %s545 = ssub.s32 %s17, 2
        // Predicated region
        $region60: #{tpu_custom_call.1} parent=58 // pred_check
          %p546 = pneg %p114
        $region61: #{tpu_custom_call.1} parent=58 // pred_check_branch
          %548 = sbr.rel (%p546) target = $region63
        $region62: #{tpu_custom_call.1} parent=58 // pred_region
          %s549 = sand.u32 %s99, 1
          %s550 = scalar_lea.sflag [#allocation8], %s549
          %s551 = sand.u32 %s99, 1
          %s552 = smul.addr %s551, 4
          %s553 = scalar_lea.vmem [#allocation11], %s552
          %555 = dma.done %s550, 64
        $region63: #{tpu_custom_call.1} parent=58 // pred_fallthru
          _
      $region59: #{tpu_custom_call.1} parent=5 // pred_fallthru
        _
    $region6: #{tpu_custom_call.1} parent=1 // loop_footer
      %s21 = sadd.s32 1, %s17
    $region7: #{tpu_custom_call.1} parent=1 // loop_footer_branch
      %16 = sbr.rel target = $region3
    $region8: #{tpu_custom_call.1} parent=1 // loop_exit
      _
    %556 = vsyncpa [#allocation7], 1
    %s557 = scalar_lea.sflag [#allocation7], 1
    %558 = vsyncpa %s557, 1
    %559 = vsyncpa [#allocation10], 1
    %s560 = scalar_lea.sflag [#allocation10], 1
    %561 = vsyncpa %s560, 1
    %562 = vsyncpa [#allocation8], 1
    %s563 = scalar_lea.sflag [#allocation8], 1
    %564 = vsyncpa %s563, 1

</llo_original>
